<compile_context>
chip_gen: v7x
topology: tpu7x:2x2x1
jax: 0.10.0
libtpu: 0.0.40
codegen_flags: <defaults>
</compile_context>

<pallas_src>
import functools

import jax
import jax.numpy as jnp
from jax.experimental import pallas as pl
from jax.experimental.pallas import tpu as pltpu

NON_IMAGE_DIM = 3
EMBEDDING_DIM = 256
HIDDEN = 128
BN_EPS = 1e-5
COS_EPS = 1e-8
TILE_B = 1024  # rows per grid step (ess tile = 1 MiB bf16 -> ~10 MiB total VMEM)


def _pewe_kernel(ni_ref, es_ref, w1_ref, w2_ref, b2_ref, out_ref, *,
                 hidden, embedding_dim):
    H, E = hidden, embedding_dim
    ni = ni_ref[...]                      # [tb, 8]    f32  (x1 | x2 | 1 | 0)
    es = es_ref[...]                      # [tb, 2E]   bf16
    w1 = w1_ref[...]                      # [8, 2H]    f32  (block-diag + bias row)
    w2 = w2_ref[...]                      # [2H, 2H]   bf16 (block-diag, BN folded)
    b2 = b2_ref[...]                      # [1, 2H]    f32  (BN folded)
    tb = ni.shape[0]

    # ---- parser (both passes at once): Linear -> ReLU -> [BN folded] -> Linear
    h = jnp.dot(ni, w1, preferred_element_type=jnp.float32)        # MXU, K=8
    h = jnp.maximum(h, 0.0)               # ReLU; Dropout == identity (eval mode)
    y = jnp.dot(h.astype(w2.dtype), w2,
                preferred_element_type=jnp.float32) + b2           # MXU, [tb, 2H]
    y1 = y[:, :H]                         # parser(x1)
    y2 = y[:, H:]                         # parser(x2)

    ef = es.astype(jnp.float32)           # f32 elementwise math (v5e: no bf16 VALU)
    e1 = ef[:, :E]
    e2 = ef[:, E:]

    # ---- cosine of cat(y, e): row reductions on the MXU (ones-vector dots),
    # keeping the XLU idle; products are plain VPU elementwise ops.
    ones_h = jnp.ones((H, 1), jnp.float32)
    ones_e = jnp.ones((E, 1), jnp.float32)

    def rsum(a, ones):                    # [tb, K] -> [tb, 1] via MXU
        return jnp.dot(a, ones, preferred_element_type=jnp.float32)

    d_col = rsum(y1 * y2, ones_h) + rsum(e1 * e2, ones_e)
    n1sq = rsum(y1 * y1, ones_h) + rsum(e1 * e1, ones_e)
    n2sq = rsum(y2 * y2, ones_h) + rsum(e2 * e2, ones_e)

    eps2 = COS_EPS * COS_EPS              # clamp n^2 at eps^2 == clamp n at eps
    inv = (jax.lax.rsqrt(jnp.maximum(n1sq, eps2)) *
           jax.lax.rsqrt(jnp.maximum(n2sq, eps2)))                 # EUP
    p_col = (d_col * inv + 1.0) * 0.5     # [tb, 1] per-row result (batch on sublanes)

    # ---- lane-dense output: move p from sublanes into lanes with tiny MXU
    # "diag transposes" (ones[1,c] @ (I_c * p_chunk)); store dense row slices.
    def make_eye(n):
        return (jax.lax.broadcasted_iota(jnp.int32, (n, n), 0) ==
                jax.lax.broadcasted_iota(jnp.int32, (n, n), 1)).astype(jnp.float32)

    def emit(start, size, eye, ones_row):
        chunk = p_col[start:start + size, :]                        # [size, 1]
        row = jnp.dot(ones_row, eye * chunk,
                      preferred_element_type=jnp.float32)           # [1, size]
        out_ref[:, :, start:start + size] = row.reshape(1, 1, size)

    ch = min(128, tb)
    eye_m = make_eye(ch)
    ones_r = jnp.ones((1, ch), jnp.float32)
    for c in range(tb // ch):             # static unroll (tb is static)
        emit(c * ch, ch, eye_m, ones_r)
    rem = tb % ch
    if rem:
        emit(tb - rem, rem, make_eye(rem), jnp.ones((1, rem), jnp.float32))


def init_pewe_params(key, non_image_dim=NON_IMAGE_DIM, hidden=HIDDEN,
                     dtype=jnp.float32):
    """Parameter init matching PyTorch model_init(); BN running stats are made
    non-trivial (as after training) so the BN->Linear folding is exercised."""
    k_w1, k_w2, k_g, k_b, k_m, k_v = jax.random.split(key, 6)
    # kaiming_normal_ (fan_in, relu gain): std = sqrt(2 / fan_in)
    w1 = jax.random.normal(k_w1, (non_image_dim, hidden), dtype) * jnp.sqrt(
        2.0 / non_image_dim)
    w2 = jax.random.normal(k_w2, (hidden, hidden), dtype) * jnp.sqrt(2.0 / hidden)
    b1 = jnp.zeros((1, hidden), dtype)
    b2 = jnp.zeros((1, hidden), dtype)
    gamma = 1.0 + 0.1 * jax.random.normal(k_g, (1, hidden), dtype)
    beta = 0.1 * jax.random.normal(k_b, (1, hidden), dtype)
    running_mean = 0.1 * jax.random.normal(k_m, (1, hidden), dtype)
    running_var = jax.random.uniform(k_v, (1, hidden), dtype,
                                     minval=0.5, maxval=1.5)
    return dict(w1=w1, b1=b1, gamma=gamma, beta=beta,
                mean=running_mean, var=running_var, w2=w2, b2=b2)


def _round_up(x, m):
    return (x + m - 1) // m * m


@jax.jit
def pewe_forward(non_image_x, ess, params):
    B = non_image_x.shape[0]
    nd, E, H = NON_IMAGE_DIM, EMBEDDING_DIM, HIDDEN

    # ---- host-side (tiny XLA) prep --------------------------------------
    # Fold eval-mode BatchNorm into the second Linear.
    s = params["gamma"] * jax.lax.rsqrt(params["var"] + BN_EPS)        # [1, H]
    w2_eff = params["w2"] * jnp.reshape(s, (H, 1))                      # [H, H]
    b2_eff = params["b2"] + (params["beta"] - params["mean"] * s) @ params["w2"]

    # Block-diagonal weights: both parser passes and the layer-1 bias share one
    # MXU dot per layer inside the kernel (no stacking / reshapes needed).
    w1, b1 = params["w1"], params["b1"]
    zH = jnp.zeros((nd, H), w1.dtype)
    w1_blk = jnp.concatenate([
        jnp.concatenate([w1, zH], axis=1),         # rows 0..2 -> pass-1 lanes
        jnp.concatenate([zH, w1], axis=1),         # rows 3..5 -> pass-2 lanes
        jnp.concatenate([b1, b1], axis=1),         # row 6: bias (pairs with ones col)
        jnp.zeros((1, 2 * H), w1.dtype),           # row 7: padding
    ], axis=0)                                     # [8, 2H] f32
    w2_blk = jnp.zeros((2 * H, 2 * H), jnp.float32)
    w2_blk = w2_blk.at[:H, :H].set(w2_eff).at[H:, H:].set(w2_eff)
    w2_blk = w2_blk.astype(jnp.bfloat16)           # bf16 MXU operand
    b2_blk = jnp.concatenate([b2_eff, b2_eff], axis=1)                   # [1, 2H]

    # Non-image features + ones column (bias) + zero pad -> [B, 8].
    ni_aug = jnp.concatenate(
        [non_image_x,
         jnp.ones((B, 1), non_image_x.dtype),
         jnp.zeros((B, 1), non_image_x.dtype)], axis=1)

    # ess is ~99% of HBM traffic -> ship it bf16 (f32 accumulation in-kernel).
    # TODO(synk): store/pass ess as bf16 upstream so this cast pass disappears.
    es_b = ess.astype(jnp.bfloat16)

    # Tile size: multiple of 128 rows, and >=2 grid steps whenever possible so
    # ("parallel",) shards the batch grid across v7x's two TensorCores.
    if B >= 256:
        tb = min(TILE_B, _round_up(pl.cdiv(B, 2), 128))
    else:
        tb = B
    nt = pl.cdiv(B, tb)

    kernel = functools.partial(_pewe_kernel, hidden=H, embedding_dim=E)

    cost = pl.CostEstimate(
        flops=int(B) * 2 * (8 * 2 * H + 2 * H * 2 * H + 3 * (H + E)),
        transcendentals=2 * int(B),
        bytes_accessed=int(B) * (8 * 4 + 2 * E * 2 + 4)
        + 8 * 2 * H * 4 + 2 * H * 2 * H * 2 + 2 * H * 4)

    out = pl.pallas_call(
        kernel,
        out_shape=jax.ShapeDtypeStruct((nt, 1, tb), jnp.float32),
        grid_spec=pltpu.PrefetchScalarGridSpec(
            num_scalar_prefetch=0,
            grid=(nt,),
            in_specs=[
                pl.BlockSpec((tb, 8), lambda i: (i, 0)),          # ni tile
                pl.BlockSpec((tb, 2 * E), lambda i: (i, 0)),      # ess tile (bf16)
                pl.BlockSpec((8, 2 * H), lambda i: (0, 0)),       # W1_blk (resident)
                pl.BlockSpec((2 * H, 2 * H), lambda i: (0, 0)),   # W2_blk (resident)
                pl.BlockSpec((1, 2 * H), lambda i: (0, 0)),       # b2_blk (resident)
            ],
            out_specs=pl.BlockSpec((1, 1, tb), lambda i: (i, 0, 0)),
        ),
        compiler_params=pltpu.CompilerParams(
            dimension_semantics=("parallel",),
            vmem_limit_bytes=40 * 1024 * 1024),
        cost_estimate=cost,
    )(ni_aug, es_b, w1_blk, w2_blk, b2_blk)

    return out.reshape(-1)[:B]                                           # [B]


def _reference(non_image_x, ess, params):
    """Pure-JAX f32 reference mirroring the PyTorch module (eval mode)."""
    def parser(x):
        h = x @ params["w1"] + params["b1"]
        h = jnp.maximum(h, 0.0)
        h = ((h - params["mean"]) * jax.lax.rsqrt(params["var"] + BN_EPS)
             * params["gamma"] + params["beta"])
        return h @ params["w2"] + params["b2"]

    y1 = parser(non_image_x[:, :NON_IMAGE_DIM])
    y2 = parser(non_image_x[:, NON_IMAGE_DIM:])
    h1 = jnp.concatenate([y1, ess[:, :EMBEDDING_DIM]], axis=1)
    h2 = jnp.concatenate([y2, ess[:, EMBEDDING_DIM:]], axis=1)
    dot = jnp.sum(h1 * h2, axis=1)
    n1 = jnp.linalg.norm(h1, axis=1)
    n2 = jnp.linalg.norm(h2, axis=1)
    cos = dot / (jnp.maximum(n1, COS_EPS) * jnp.maximum(n2, COS_EPS))
    return (cos + 1.0) * 0.5


if __name__ == "__main__":
    key = jax.random.PRNGKey(0)
    k_par, k_ni, k_es = jax.random.split(key, 3)

    B = 16
    params = init_pewe_params(k_par)
    non_image_x = jax.random.normal(k_ni, (B, 2 * NON_IMAGE_DIM), jnp.float32)
    ess = jax.random.normal(k_es, (B, 2 * EMBEDDING_DIM), jnp.float32)

    p = pewe_forward(non_image_x, ess, params)
    jax.block_until_ready(p)

    p_ref = _reference(non_image_x, ess, params)
    assert p.shape == (B,)
    # bf16 MXU operands + bf16 ess (f32 accumulation) -> loosened tolerance.
    assert jnp.allclose(p, p_ref, atol=2e-2, rtol=2e-2), (p, p_ref)

    print("KERNEL_OK")
</pallas_src>

<mosaic_0001>
module attributes {stable_mosaic.version = 11 : i64} {
  func.func @_pewe_kernel(%arg0: i32, %arg1: memref<16x8xf32, #tpu.memory_space<vmem>>, %arg2: memref<16x512xbf16, #tpu.memory_space<vmem>>, %arg3: memref<8x256xf32, #tpu.memory_space<vmem>>, %arg4: memref<256x256xbf16, #tpu.memory_space<vmem>>, %arg5: memref<1x256xf32, #tpu.memory_space<vmem>>, %arg6: memref<1x1x16xf32, #tpu.memory_space<vmem>>) attributes {dimension_semantics = [#tpu.dimension_semantics<parallel>], iteration_bounds = array<i64: 1>, scalar_prefetch = 0 : i64, scratch_operands = 0 : i64, tpu.core_type = #tpu.core_type<tc>, window_params = [{transform_indices = @transform_0, window_bounds = array<i64: 16, 8>}, {transform_indices = @transform_1, window_bounds = array<i64: 16, 512>}, {pipeline_mode = #tpu.pipeline_mode<synchronous>, transform_indices = @transform_2, window_bounds = array<i64: 8, 256>}, {pipeline_mode = #tpu.pipeline_mode<synchronous>, transform_indices = @transform_3, window_bounds = array<i64: 256, 256>}, {pipeline_mode = #tpu.pipeline_mode<synchronous>, transform_indices = @transform_4, window_bounds = array<i64: 1, 256>}, {transform_indices = @transform_5, window_bounds = array<i64: 1, 1, 16>}]} {
    %c0 = arith.constant 0 : index
    %c0_0 = arith.constant 0 : index
    %0 = vector.load %arg1[%c0, %c0_0] : memref<16x8xf32, #tpu.memory_space<vmem>>, vector<16x8xf32>
    %c0_1 = arith.constant 0 : index
    %c0_2 = arith.constant 0 : index
    %1 = vector.load %arg2[%c0_1, %c0_2] : memref<16x512xbf16, #tpu.memory_space<vmem>>, vector<16x512xbf16>
    %c0_3 = arith.constant 0 : index
    %c0_4 = arith.constant 0 : index
    %2 = vector.load %arg3[%c0_3, %c0_4] : memref<8x256xf32, #tpu.memory_space<vmem>>, vector<8x256xf32>
    %c0_5 = arith.constant 0 : index
    %c0_6 = arith.constant 0 : index
    %3 = vector.load %arg4[%c0_5, %c0_6] : memref<256x256xbf16, #tpu.memory_space<vmem>>, vector<256x256xbf16>
    %c0_7 = arith.constant 0 : index
    %c0_8 = arith.constant 0 : index
    %4 = vector.load %arg5[%c0_7, %c0_8] : memref<1x256xf32, #tpu.memory_space<vmem>>, vector<1x256xf32>
    %cst = arith.constant dense<0.000000e+00> : vector<16x256xf32>
    %5 = tpu.matmul %0, %2, %cst {dimension_numbers = #tpu.dot_dimension_numbers<[1], [0], [0], [1], [0, 0, 1, 1], [], []>} : vector<16x8xf32>, vector<8x256xf32>, vector<16x256xf32> -> vector<16x256xf32>
    %cst_9 = arith.constant 0.000000e+00 : f32
    %6 = vector.broadcast %cst_9 : f32 to vector<16x256xf32>
    %7 = arith.maximumf %5, %6 : vector<16x256xf32>
    %8 = arith.truncf %7 : vector<16x256xf32> to vector<16x256xbf16>
    %cst_10 = arith.constant dense<0.000000e+00> : vector<16x256xf32>
    %9 = tpu.matmul %8, %3, %cst_10 {dimension_numbers = #tpu.dot_dimension_numbers<[1], [0], [0], [1], [0, 0, 1, 1], [], []>} : vector<16x256xbf16>, vector<256x256xbf16>, vector<16x256xf32> -> vector<16x256xf32>
    %10 = vector.broadcast %4 : vector<1x256xf32> to vector<16x256xf32>
    %11 = arith.addf %9, %10 : vector<16x256xf32>
    %12 = vector.extract_strided_slice %11 {offsets = [0, 0], sizes = [16, 128], strides = [1, 1]} : vector<16x256xf32> to vector<16x128xf32>
    %13 = vector.extract_strided_slice %11 {offsets = [0, 128], sizes = [16, 128], strides = [1, 1]} : vector<16x256xf32> to vector<16x128xf32>
    %14 = arith.extf %1 : vector<16x512xbf16> to vector<16x512xf32>
    %15 = vector.extract_strided_slice %14 {offsets = [0, 0], sizes = [16, 256], strides = [1, 1]} : vector<16x512xf32> to vector<16x256xf32>
    %16 = vector.extract_strided_slice %14 {offsets = [0, 256], sizes = [16, 256], strides = [1, 1]} : vector<16x512xf32> to vector<16x256xf32>
    %cst_11 = arith.constant 1.000000e+00 : f32
    %17 = vector.broadcast %cst_11 : f32 to vector<128x1xf32>
    %cst_12 = arith.constant 1.000000e+00 : f32
    %18 = vector.broadcast %cst_12 : f32 to vector<256x1xf32>
    %19 = arith.mulf %12, %13 : vector<16x128xf32>
    %cst_13 = arith.constant dense<0.000000e+00> : vector<16x1xf32>
    %20 = tpu.matmul %19, %17, %cst_13 {dimension_numbers = #tpu.dot_dimension_numbers<[1], [0], [0], [1], [0, 0, 1, 1], [], []>} : vector<16x128xf32>, vector<128x1xf32>, vector<16x1xf32> -> vector<16x1xf32>
    %21 = arith.mulf %15, %16 : vector<16x256xf32>
    %cst_14 = arith.constant dense<0.000000e+00> : vector<16x1xf32>
    %22 = tpu.matmul %21, %18, %cst_14 {dimension_numbers = #tpu.dot_dimension_numbers<[1], [0], [0], [1], [0, 0, 1, 1], [], []>} : vector<16x256xf32>, vector<256x1xf32>, vector<16x1xf32> -> vector<16x1xf32>
    %23 = arith.addf %20, %22 : vector<16x1xf32>
    %24 = arith.mulf %12, %12 : vector<16x128xf32>
    %cst_15 = arith.constant dense<0.000000e+00> : vector<16x1xf32>
    %25 = tpu.matmul %24, %17, %cst_15 {dimension_numbers = #tpu.dot_dimension_numbers<[1], [0], [0], [1], [0, 0, 1, 1], [], []>} : vector<16x128xf32>, vector<128x1xf32>, vector<16x1xf32> -> vector<16x1xf32>
    %26 = arith.mulf %15, %15 : vector<16x256xf32>
    %cst_16 = arith.constant dense<0.000000e+00> : vector<16x1xf32>
    %27 = tpu.matmul %26, %18, %cst_16 {dimension_numbers = #tpu.dot_dimension_numbers<[1], [0], [0], [1], [0, 0, 1, 1], [], []>} : vector<16x256xf32>, vector<256x1xf32>, vector<16x1xf32> -> vector<16x1xf32>
    %28 = arith.addf %25, %27 : vector<16x1xf32>
    %29 = arith.mulf %13, %13 : vector<16x128xf32>
    %cst_17 = arith.constant dense<0.000000e+00> : vector<16x1xf32>
    %30 = tpu.matmul %29, %17, %cst_17 {dimension_numbers = #tpu.dot_dimension_numbers<[1], [0], [0], [1], [0, 0, 1, 1], [], []>} : vector<16x128xf32>, vector<128x1xf32>, vector<16x1xf32> -> vector<16x1xf32>
    %31 = arith.mulf %16, %16 : vector<16x256xf32>
    %cst_18 = arith.constant dense<0.000000e+00> : vector<16x1xf32>
    %32 = tpu.matmul %31, %18, %cst_18 {dimension_numbers = #tpu.dot_dimension_numbers<[1], [0], [0], [1], [0, 0, 1, 1], [], []>} : vector<16x256xf32>, vector<256x1xf32>, vector<16x1xf32> -> vector<16x1xf32>
    %33 = arith.addf %30, %32 : vector<16x1xf32>
    %cst_19 = arith.constant 1.000000e-16 : f32
    %34 = vector.broadcast %cst_19 : f32 to vector<16x1xf32>
    %35 = arith.maximumf %28, %34 : vector<16x1xf32>
    %36 = math.rsqrt %35 : vector<16x1xf32>
    %cst_20 = arith.constant 1.000000e-16 : f32
    %37 = vector.broadcast %cst_20 : f32 to vector<16x1xf32>
    %38 = arith.maximumf %33, %37 : vector<16x1xf32>
    %39 = math.rsqrt %38 : vector<16x1xf32>
    %40 = arith.mulf %36, %39 : vector<16x1xf32>
    %41 = arith.mulf %23, %40 : vector<16x1xf32>
    %cst_21 = arith.constant 1.000000e+00 : f32
    %42 = vector.broadcast %cst_21 : f32 to vector<16x1xf32>
    %43 = arith.addf %41, %42 : vector<16x1xf32>
    %cst_22 = arith.constant 5.000000e-01 : f32
    %44 = vector.broadcast %cst_22 : f32 to vector<16x1xf32>
    %45 = arith.mulf %43, %44 : vector<16x1xf32>
    %46 = tpu.iota {dimensions = array<i32: 0>} : vector<16x16xi32>
    %47 = tpu.iota {dimensions = array<i32: 1>} : vector<16x16xi32>
    %48 = arith.cmpi eq, %46, %47 : vector<16x16xi32>
    %49 = arith.extui %48 : vector<16x16xi1> to vector<16x16xi32>
    %50 = arith.sitofp %49 : vector<16x16xi32> to vector<16x16xf32>
    %cst_23 = arith.constant 1.000000e+00 : f32
    %51 = vector.broadcast %cst_23 : f32 to vector<1x16xf32>
    %52 = vector.broadcast %45 : vector<16x1xf32> to vector<16x16xf32>
    %53 = arith.mulf %50, %52 : vector<16x16xf32>
    %cst_24 = arith.constant dense<0.000000e+00> : vector<1x16xf32>
    %54 = tpu.matmul %51, %53, %cst_24 {dimension_numbers = #tpu.dot_dimension_numbers<[1], [0], [0], [1], [0, 0, 1, 1], [], []>} : vector<1x16xf32>, vector<16x16xf32>, vector<1x16xf32> -> vector<1x16xf32>
    %55 = vector.shape_cast %54 : vector<1x16xf32> to vector<1x1x16xf32>
    %c0_25 = arith.constant 0 : index
    %c0_26 = arith.constant 0 : index
    %c0_27 = arith.constant 0 : index
    %56 = vector.load %arg6[%c0_25, %c0_26, %c0_27] : memref<1x1x16xf32, #tpu.memory_space<vmem>>, vector<1x1x16xf32>
    tpu.vector_store %arg6[%c0_25, %c0_26, %c0_27], %55 {strides = array<i32>} : memref<1x1x16xf32, #tpu.memory_space<vmem>>, vector<1x1x16xf32>,
    return
  }
  func.func @transform_0(%arg0: i32) -> (i32, i32) {
    %c0_i32 = arith.constant 0 : i32
    %c0_i32_0 = arith.constant 0 : i32
    return %arg0, %c0_i32 : i32, i32
  }
  func.func @transform_1(%arg0: i32) -> (i32, i32) {
    %c0_i32 = arith.constant 0 : i32
    %c0_i32_0 = arith.constant 0 : i32
    return %arg0, %c0_i32 : i32, i32
  }
  func.func @transform_2(%arg0: i32) -> (i32, i32) {
    %c0_i32 = arith.constant 0 : i32
    %c0_i32_0 = arith.constant 0 : i32
    %c0_i32_1 = arith.constant 0 : i32
    return %c0_i32, %c0_i32_0 : i32, i32
  }
  func.func @transform_3(%arg0: i32) -> (i32, i32) {
    %c0_i32 = arith.constant 0 : i32
    %c0_i32_0 = arith.constant 0 : i32
    %c0_i32_1 = arith.constant 0 : i32
    return %c0_i32, %c0_i32_0 : i32, i32
  }
  func.func @transform_4(%arg0: i32) -> (i32, i32) {
    %c0_i32 = arith.constant 0 : i32
    %c0_i32_0 = arith.constant 0 : i32
    %c0_i32_1 = arith.constant 0 : i32
    return %c0_i32, %c0_i32_0 : i32, i32
  }
  func.func @transform_5(%arg0: i32) -> (i32, i32, i32) {
    %c0_i32 = arith.constant 0 : i32
    %c0_i32_0 = arith.constant 0 : i32
    %c0_i32_1 = arith.constant 0 : i32
    return %arg0, %c0_i32, %c0_i32_0 : i32, i32, i32
  }
}

</mosaic_0001>

<llo_original>
// kernel: pewe_forward.1
$region0: #{pewe_forward.1}
  #allocation0 [shape = 'u32[]', space=smem, size = 0x4, offset = 0x4, fixed_abs, tag = 'smem constant byte address 0x4 - core index']
  #allocation1 [shape = 'u32[144,128]{1,0:T(1,128)}', space=vmem, size = 0x12000, scoped, tag = 'internal scratch']
  %s0 = inlined_call_operand.vmem [shape: f32[16,8], index: 0, kind: input, shape index: {}]
  %s1 = inlined_call_operand.vmem [shape: bf16[16,512], index: 1, kind: input, shape index: {}]
  %s2 = inlined_call_operand.vmem [shape: f32[8,256], index: 2, kind: input, shape index: {}]
  %s3 = inlined_call_operand.vmem [shape: bf16[256,256], index: 3, kind: input, shape index: {}]
  %s4 = inlined_call_operand.vmem [shape: f32[1,256], index: 4, kind: input, shape index: {}]
  %s5 = inlined_call_operand.hbm [shape: f32[1,1,16], index: 5, kind: output, shape index: {}]
  %s6 = sld [smem:[#allocation0]]
  $region30: #{pewe_forward.1} parent=0
    _
  %s8 = ssub.s32 1, %s6
  %s9 = scalar_select 0, %s8, %s6
  $region1: #{pewe_forward.1} parent=0
    #allocation2 [shape = 'u8[512]{0}', space=vmem, size = 0x400, scoped, tag = 'output window, operand 0, single buffered']
    #allocation3 [shape = 's32[1]{0}', space=sflag, size = 0x4, scoped, tag = 'scoped memory for pewe_forward.1']
    %10 = vsyncpa [#allocation3], 0
    // Predicated region
    $region2: #{pewe_forward.1} parent=1 // pred_check
      _
    $region3: #{pewe_forward.1} parent=1 // pred_check_branch
      %12 = sbr.rel (0) target = $region5
    $region4: #{pewe_forward.1} parent=1 // pred_region
      _
    $region5: #{pewe_forward.1} parent=1 // pred_fallthru
      _
    // Predicated region
    $region6: #{pewe_forward.1} parent=1 // pred_check
      _
    $region7: #{pewe_forward.1} parent=1 // pred_check_branch
      %14 = sbr.rel (0) target = $region9
    $region8: #{pewe_forward.1} parent=1 // pred_region
      _
    $region9: #{pewe_forward.1} parent=1 // pred_fallthru
      _
    // Predicated region
    $region10: #{pewe_forward.1} parent=1 // pred_check
      _
    $region11: #{pewe_forward.1} parent=1 // pred_check_branch
      %16 = sbr.rel (0) target = $region13
    $region12: #{pewe_forward.1} parent=1 // pred_region
      _
    $region13: #{pewe_forward.1} parent=1 // pred_fallthru
      _
    // Predicated region
    $region14: #{pewe_forward.1} parent=1 // pred_check
      _
    $region15: #{pewe_forward.1} parent=1 // pred_check_branch
      %18 = sbr.rel (0) target = $region17
    $region16: #{pewe_forward.1} parent=1 // pred_region
      _
    $region17: #{pewe_forward.1} parent=1 // pred_fallthru
      _
    // Predicated region
    $region18: #{pewe_forward.1} parent=1 // pred_check
      _
    $region19: #{pewe_forward.1} parent=1 // pred_check_branch
      %20 = sbr.rel (0) target = $region21
    $region20: #{pewe_forward.1} parent=1 // pred_region
      _
    $region21: #{pewe_forward.1} parent=1 // pred_fallthru
      _
    %v21 = vld [vmem:[%s0] sm:$0xff]
    %v22 = vld [vmem:[%s0 + $0x8] sm:$0xff]
    %v23 = vld [vmem:[%s1] sm:$0xff]
    %v24 = vld [vmem:[%s1 + $0x8] sm:$0xff]
    %v25 = vld [vmem:[%s1 + $0x10] sm:$0xff]
    %v26 = vld [vmem:[%s1 + $0x18] sm:$0xff]
    %v27 = vld [vmem:[%s2] sm:$0xff]
    %v28 = vld [vmem:[%s2 + $0x8] sm:$0xff]
    %v29 = vld [vmem:[%s3] sm:$0xff]
    %v30 = vld [vmem:[%s3 + $0x8] sm:$0xff]
    %v31 = vld [vmem:[%s3 + $0x10] sm:$0xff]
    %v32 = vld [vmem:[%s3 + $0x18] sm:$0xff]
    %v33 = vld [vmem:[%s3 + $0x20] sm:$0xff]
    %v34 = vld [vmem:[%s3 + $0x28] sm:$0xff]
    %v35 = vld [vmem:[%s3 + $0x30] sm:$0xff]
    %v36 = vld [vmem:[%s3 + $0x38] sm:$0xff]
    %v37 = vld [vmem:[%s3 + $0x40] sm:$0xff]
    %v38 = vld [vmem:[%s3 + $0x48] sm:$0xff]
    %v39 = vld [vmem:[%s3 + $0x50] sm:$0xff]
    %v40 = vld [vmem:[%s3 + $0x58] sm:$0xff]
    %v41 = vld [vmem:[%s3 + $0x60] sm:$0xff]
    %v42 = vld [vmem:[%s3 + $0x68] sm:$0xff]
    %v43 = vld [vmem:[%s3 + $0x70] sm:$0xff]
    %v44 = vld [vmem:[%s3 + $0x78] sm:$0xff]
    %v45 = vld [vmem:[%s3 + $0x80] sm:$0xff]
    %v46 = vld [vmem:[%s3 + $0x88] sm:$0xff]
    %v47 = vld [vmem:[%s3 + $0x90] sm:$0xff]
    %v48 = vld [vmem:[%s3 + $0x98] sm:$0xff]
    %v49 = vld [vmem:[%s3 + $0xa0] sm:$0xff]
    %v50 = vld [vmem:[%s3 + $0xa8] sm:$0xff]
    %v51 = vld [vmem:[%s3 + $0xb0] sm:$0xff]
    %v52 = vld [vmem:[%s3 + $0xb8] sm:$0xff]
    %v53 = vld [vmem:[%s3 + $0xc0] sm:$0xff]
    %v54 = vld [vmem:[%s3 + $0xc8] sm:$0xff]
    %v55 = vld [vmem:[%s3 + $0xd0] sm:$0xff]
    %v56 = vld [vmem:[%s3 + $0xd8] sm:$0xff]
    %v57 = vld [vmem:[%s3 + $0xe0] sm:$0xff]
    %v58 = vld [vmem:[%s3 + $0xe8] sm:$0xff]
    %v59 = vld [vmem:[%s3 + $0xf0] sm:$0xff]
    %v60 = vld [vmem:[%s3 + $0xf8] sm:$0xff]
    %v61 = vld [vmem:[%s4] sm:$0x3]
    %vm62 = vcmask 64512
    %v64 = vsel %vm62, %v21, 0
    %v67 = vsel %vm62, %v22, 0
    %69 = vmatprep.subr.mxu0 %v28
    %70 = vmatpush1.msra.mxu0 %v27
    %71 = vmatprep.subr.mxu0 0.0
    %72 = vmatpush1.msra.mxu0 0.0
    %73 = vmatprep.subr.mxu0 0.0
    %74 = vmatpush1.msra.mxu0 0.0
    %75 = vmatprep.subr.mxu0 0.0
    %76 = vmatpush1.msra.mxu0 0.0
    %77 = vmatprep.subr.mxu0 0.0
    %78 = vmatpush1.msra.mxu0 0.0
    %79 = vmatprep.subr.mxu0 0.0
    %80 = vmatpush1.msra.mxu0 0.0
    %81 = vmatprep.subr.mxu0 0.0
    %82 = vmatpush1.msra.mxu0 0.0
    %83 = vmatprep.subr.mxu0 0.0
    %84 = vmatpush1.msra.mxu0 0.0
    %85 = vmatprep.subr.mxu0 0.0
    %86 = vmatpush1.msra.mxu0 0.0
    %87 = vmatprep.subr.mxu0 0.0
    %88 = vmatpush1.msra.mxu0 0.0
    %89 = vmatprep.subr.mxu0 0.0
    %90 = vmatpush1.msra.mxu0 0.0
    %91 = vmatprep.subr.mxu0 0.0
    %92 = vmatpush1.msra.mxu0 0.0
    %93 = vmatprep.subr.mxu0 0.0
    %94 = vmatpush1.msra.mxu0 0.0
    %95 = vmatprep.subr.mxu0 0.0
    %96 = vmatpush1.msra.mxu0 0.0
    %97 = vmatprep.subr.mxu0 0.0
    %98 = vmatpush1.msra.mxu0 0.0
    %99 = vmatprep.subr.mxu0 0.0
    %100 = vmatpush1.msra.mxu0 0.0
    %101 = vmatprep.subr.mxu0 0.0
    %102 = vmatpush1.msra.mxu0 0.0
    %103 = vmatprep.subr.mxu0 0.0
    %104 = vmatpush1.msra.mxu0 0.0
    %105 = vmatprep.subr.mxu0 0.0
    %106 = vmatpush1.msra.mxu0 0.0
    %107 = vmatprep.subr.mxu0 0.0
    %108 = vmatpush1.msra.mxu0 0.0
    %109 = vmatprep.subr.mxu0 0.0
    %110 = vmatpush1.msra.mxu0 0.0
    %111 = vmatprep.subr.mxu0 0.0
    %112 = vmatpush1.msra.mxu0 0.0
    %113 = vmatprep.subr.mxu0 0.0
    %114 = vmatpush1.msra.mxu0 0.0
    %115 = vmatprep.subr.mxu0 0.0
    %116 = vmatpush1.msra.mxu0 0.0
    %117 = vmatprep.subr.mxu0 0.0
    %118 = vmatpush1.msra.mxu0 0.0
    %119 = vmatprep.subr.mxu0 0.0
    %120 = vmatpush1.msra.mxu0 0.0
    %121 = vmatprep.subr.mxu0 0.0
    %122 = vmatpush1.msra.mxu0 0.0
    %123 = vmatprep.subr.mxu0 0.0
    %124 = vmatpush1.msra.mxu0 0.0
    %125 = vmatprep.subr.mxu0 0.0
    %126 = vmatpush1.msra.mxu0 0.0
    %127 = vmatprep.subr.mxu0 0.0
    %128 = vmatpush1.msra.mxu0 0.0
    %129 = vmatprep.subr.mxu0 0.0
    %130 = vmatpush1.msra.mxu0 0.0
    %131 = vmatprep.subr.mxu0 0.0
    %132 = vmatpush1.msra.mxu0 0.0
    %133 = vmatprep.mubr.f32.mxu0 0.0
    %134 = vmatmul.mubr.f32.gmra.mrb[0].mxu0 %v64
    %v135 = vpop.f32.mrb[0].mxu0
    %v136 = vadd.f32 0.0, %v135
    %v137 = vpop.f32.mrb[0].mxu0
    %v138 = vadd.f32 0.0, %v137
    %139 = vmatprep.mubr.f32.mxu0 0.0
    %140 = vmatmul.mubr.f32.gmra.mrb[0].mxu0 %v67
    %v141 = vpop.f32.mrb[0].mxu0
    %v142 = vadd.f32 0.0, %v141
    %v143 = vpop.f32.mrb[0].mxu0
    %v144 = vadd.f32 0.0, %v143
    %145 = vdwg.mxu0
    %v146 = vmax.f32 %v136, 0.0
    %v147 = vmax.f32 %v138, 0.0
    %v148 = vmax.f32 %v142, 0.0
    %v149 = vmax.f32 %v144, 0.0
    %v150 = vpack.c.bf16 %v148, %v146
    %v151 = vpack.c.bf16 %v149, %v147
    %v153 = vlaneseq
    %v154 = vshrl.u32 %v153, 7
    %v155 = vsub.s32 0, %v154
    %v156 = vrot.slane %v61, %v155
    %v157 = vlaneseq
    %v158 = vshrl.u32 %v157, 7
    %v159 = vsub.s32 1, %v158
    %v160 = vrot.slane %v61, %v159
    %v195 = vunpack.c.l.b16 %v29
    %v196 = vunpack.c.h.b16 %v29
    %v197 = vunpack.c.l.b16 %v30
    %v198 = vunpack.c.h.b16 %v30
    %v199 = vunpack.c.l.b16 %v31
    %v200 = vunpack.c.h.b16 %v31
    %v201 = vunpack.c.l.b16 %v32
    %v202 = vunpack.c.h.b16 %v32
    %v203 = vunpack.c.l.b16 %v33
    %v204 = vunpack.c.h.b16 %v33
    %v205 = vunpack.c.l.b16 %v34
    %v206 = vunpack.c.h.b16 %v34
    %v207 = vunpack.c.l.b16 %v35
    %v208 = vunpack.c.h.b16 %v35
    %v209 = vunpack.c.l.b16 %v36
    %v210 = vunpack.c.h.b16 %v36
    %v211 = vunpack.c.l.b16 %v37
    %v212 = vunpack.c.h.b16 %v37
    %v213 = vunpack.c.l.b16 %v38
    %v214 = vunpack.c.h.b16 %v38
    %v215 = vunpack.c.l.b16 %v39
    %v216 = vunpack.c.h.b16 %v39
    %v217 = vunpack.c.l.b16 %v40
    %v218 = vunpack.c.h.b16 %v40
    %v219 = vunpack.c.l.b16 %v41
    %v220 = vunpack.c.h.b16 %v41
    %v221 = vunpack.c.l.b16 %v42
    %v222 = vunpack.c.h.b16 %v42
    %v223 = vunpack.c.l.b16 %v43
    %v224 = vunpack.c.h.b16 %v43
    %v225 = vunpack.c.l.b16 %v44
    %v226 = vunpack.c.h.b16 %v44
    %v227 = vunpack.c.l.b16 %v45
    %v228 = vunpack.c.h.b16 %v45
    %v229 = vunpack.c.l.b16 %v46
    %v230 = vunpack.c.h.b16 %v46
    %v231 = vunpack.c.l.b16 %v47
    %v232 = vunpack.c.h.b16 %v47
    %v233 = vunpack.c.l.b16 %v48
    %v234 = vunpack.c.h.b16 %v48
    %v235 = vunpack.c.l.b16 %v49
    %v236 = vunpack.c.h.b16 %v49
    %v237 = vunpack.c.l.b16 %v50
    %v238 = vunpack.c.h.b16 %v50
    %v239 = vunpack.c.l.b16 %v51
    %v240 = vunpack.c.h.b16 %v51
    %v241 = vunpack.c.l.b16 %v52
    %v242 = vunpack.c.h.b16 %v52
    %v243 = vunpack.c.l.b16 %v53
    %v244 = vunpack.c.h.b16 %v53
    %v245 = vunpack.c.l.b16 %v54
    %v246 = vunpack.c.h.b16 %v54
    %v247 = vunpack.c.l.b16 %v55
    %v248 = vunpack.c.h.b16 %v55
    %v249 = vunpack.c.l.b16 %v56
    %v250 = vunpack.c.h.b16 %v56
    %v251 = vunpack.c.l.b16 %v57
    %v252 = vunpack.c.h.b16 %v57
    %v253 = vunpack.c.l.b16 %v58
    %v254 = vunpack.c.h.b16 %v58
    %v255 = vunpack.c.l.b16 %v59
    %v256 = vunpack.c.h.b16 %v59
    %v257 = vunpack.c.l.b16 %v60
    %v258 = vunpack.c.h.b16 %v60
    %v259 = vpack.c.b16 %v197, %v195
    %v260 = vpack.c.b16 %v198, %v196
    %v261 = vpack.c.b16 %v201, %v199
    %v262 = vpack.c.b16 %v202, %v200
    %v263 = vpack.c.b16 %v205, %v203
    %v264 = vpack.c.b16 %v206, %v204
    %v265 = vpack.c.b16 %v209, %v207
    %v266 = vpack.c.b16 %v210, %v208
    %v267 = vpack.c.b16 %v213, %v211
    %v268 = vpack.c.b16 %v214, %v212
    %v269 = vpack.c.b16 %v217, %v215
    %v270 = vpack.c.b16 %v218, %v216
    %v271 = vpack.c.b16 %v221, %v219
    %v272 = vpack.c.b16 %v222, %v220
    %v273 = vpack.c.b16 %v225, %v223
    %v274 = vpack.c.b16 %v226, %v224
    %v275 = vpack.c.b16 %v229, %v227
    %v276 = vpack.c.b16 %v230, %v228
    %v277 = vpack.c.b16 %v233, %v231
    %v278 = vpack.c.b16 %v234, %v232
    %v279 = vpack.c.b16 %v237, %v235
    %v280 = vpack.c.b16 %v238, %v236
    %v281 = vpack.c.b16 %v241, %v239
    %v282 = vpack.c.b16 %v242, %v240
    %v283 = vpack.c.b16 %v245, %v243
    %v284 = vpack.c.b16 %v246, %v244
    %v285 = vpack.c.b16 %v249, %v247
    %v286 = vpack.c.b16 %v250, %v248
    %v287 = vpack.c.b16 %v253, %v251
    %v288 = vpack.c.b16 %v254, %v252
    %v289 = vpack.c.b16 %v257, %v255
    %v290 = vpack.c.b16 %v258, %v256
    %323 = vmatprep.subr.bf16.mxu0 %v260
    %324 = vmatpush1.bf16.msra.mxu0 %v259
    %325 = vmatprep.subr.bf16.mxu0 %v262
    %326 = vmatpush1.bf16.msra.mxu0 %v261
    %327 = vmatprep.subr.bf16.mxu0 %v264
    %328 = vmatpush1.bf16.msra.mxu0 %v263
    %329 = vmatprep.subr.bf16.mxu0 %v266
    %330 = vmatpush1.bf16.msra.mxu0 %v265
    %331 = vmatprep.subr.bf16.mxu0 %v268
    %332 = vmatpush1.bf16.msra.mxu0 %v267
    %333 = vmatprep.subr.bf16.mxu0 %v270
    %334 = vmatpush1.bf16.msra.mxu0 %v269
    %335 = vmatprep.subr.bf16.mxu0 %v272
    %336 = vmatpush1.bf16.msra.mxu0 %v271
    %337 = vmatprep.subr.bf16.mxu0 %v274
    %338 = vmatpush1.bf16.msra.mxu0 %v273
    %339 = vmatprep.subr.bf16.mxu0 %v276
    %340 = vmatpush1.bf16.msra.mxu0 %v275
    %341 = vmatprep.subr.bf16.mxu0 %v278
    %342 = vmatpush1.bf16.msra.mxu0 %v277
    %343 = vmatprep.subr.bf16.mxu0 %v280
    %344 = vmatpush1.bf16.msra.mxu0 %v279
    %345 = vmatprep.subr.bf16.mxu0 %v282
    %346 = vmatpush1.bf16.msra.mxu0 %v281
    %347 = vmatprep.subr.bf16.mxu0 %v284
    %348 = vmatpush1.bf16.msra.mxu0 %v283
    %349 = vmatprep.subr.bf16.mxu0 %v286
    %350 = vmatpush1.bf16.msra.mxu0 %v285
    %351 = vmatprep.subr.bf16.mxu0 %v288
    %352 = vmatpush1.bf16.msra.mxu0 %v287
    %353 = vmatprep.subr.bf16.mxu0 %v290
    %354 = vmatpush1.bf16.msra.mxu0 %v289
    %355 = vmatprep.mubr.bf16.mxu0 %v151
    %356 = vmatmul.mubr.bf16.gmra.mrb[0].mxu0 %v150
    %v357 = vpop.f32.mrb[0].mxu0
    %v358 = vadd.f32 %v156, %v357
    %v359 = vpop.f32.mrb[0].mxu0
    %v360 = vadd.f32 %v160, %v359
    %v361 = vpop.f32.mrb[0].mxu0
    %v362 = vadd.f32 %v156, %v361
    %v363 = vpop.f32.mrb[0].mxu0
    %v364 = vadd.f32 %v160, %v363
    %365 = vdwg.mxu0
    %v366 = vunpack.c.l.bf16 %v23
    %v367 = vunpack.c.h.bf16 %v23
    %v368 = vunpack.c.l.bf16 %v24
    %v369 = vunpack.c.h.bf16 %v24
    %v370 = vunpack.c.l.bf16 %v25
    %v371 = vunpack.c.h.bf16 %v25
    %v372 = vunpack.c.l.bf16 %v26
    %v373 = vunpack.c.h.bf16 %v26
    %v374 = vmul.f32 %v358, %v360
    %v375 = vmul.f32 %v362, %v364
    %v376 = vmul.f32 %v366, %v368
    %v377 = vmul.f32 %v367, %v369
    %v378 = vmul.f32 %v370, %v372
    %v379 = vmul.f32 %v371, %v373
    %380 = vmatprep.subr.mxu0 0.0
    %381 = vmatpush1.msra.mxu0 1.0
    %382 = vmatprep.subr.mxu0 0.0
    %383 = vmatpush1.msra.mxu0 1.0
    %384 = vmatprep.subr.mxu0 0.0
    %385 = vmatpush1.msra.mxu0 1.0
    %386 = vmatprep.subr.mxu0 0.0
    %387 = vmatpush1.msra.mxu0 1.0
    %388 = vmatprep.subr.mxu0 0.0
    %389 = vmatpush1.msra.mxu0 1.0
    %390 = vmatprep.subr.mxu0 0.0
    %391 = vmatpush1.msra.mxu0 1.0
    %392 = vmatprep.subr.mxu0 0.0
    %393 = vmatpush1.msra.mxu0 1.0
    %394 = vmatprep.subr.mxu0 0.0
    %395 = vmatpush1.msra.mxu0 1.0
    %396 = vmatprep.subr.mxu0 0.0
    %397 = vmatpush1.msra.mxu0 1.0
    %398 = vmatprep.subr.mxu0 0.0
    %399 = vmatpush1.msra.mxu0 1.0
    %400 = vmatprep.subr.mxu0 0.0
    %401 = vmatpush1.msra.mxu0 1.0
    %402 = vmatprep.subr.mxu0 0.0
    %403 = vmatpush1.msra.mxu0 1.0
    %404 = vmatprep.subr.mxu0 0.0
    %405 = vmatpush1.msra.mxu0 1.0
    %406 = vmatprep.subr.mxu0 0.0
    %407 = vmatpush1.msra.mxu0 1.0
    %408 = vmatprep.subr.mxu0 0.0
    %409 = vmatpush1.msra.mxu0 1.0
    %410 = vmatprep.subr.mxu0 0.0
    %411 = vmatpush1.msra.mxu0 1.0
    %412 = vmatprep.subr.mxu0 0.0
    %413 = vmatpush1.msra.mxu0 1.0
    %414 = vmatprep.subr.mxu0 0.0
    %415 = vmatpush1.msra.mxu0 1.0
    %416 = vmatprep.subr.mxu0 0.0
    %417 = vmatpush1.msra.mxu0 1.0
    %418 = vmatprep.subr.mxu0 0.0
    %419 = vmatpush1.msra.mxu0 1.0
    %420 = vmatprep.subr.mxu0 0.0
    %421 = vmatpush1.msra.mxu0 1.0
    %422 = vmatprep.subr.mxu0 0.0
    %423 = vmatpush1.msra.mxu0 1.0
    %424 = vmatprep.subr.mxu0 0.0
    %425 = vmatpush1.msra.mxu0 1.0
    %426 = vmatprep.subr.mxu0 0.0
    %427 = vmatpush1.msra.mxu0 1.0
    %428 = vmatprep.subr.mxu0 0.0
    %429 = vmatpush1.msra.mxu0 1.0
    %430 = vmatprep.subr.mxu0 0.0
    %431 = vmatpush1.msra.mxu0 1.0
    %432 = vmatprep.subr.mxu0 0.0
    %433 = vmatpush1.msra.mxu0 1.0
    %434 = vmatprep.subr.mxu0 0.0
    %435 = vmatpush1.msra.mxu0 1.0
    %436 = vmatprep.subr.mxu0 0.0
    %437 = vmatpush1.msra.mxu0 1.0
    %438 = vmatprep.subr.mxu0 0.0
    %439 = vmatpush1.msra.mxu0 1.0
    %440 = vmatprep.subr.mxu0 0.0
    %441 = vmatpush1.msra.mxu0 1.0
    %442 = vmatprep.subr.mxu0 0.0
    %443 = vmatpush1.msra.mxu0 1.0
    %444 = vmatprep.mubr.f32.mxu0 %v377
    %445 = vmatmul.mubr.f32.gmra.mrb[0].mxu0 %v376
    %v446 = vpop.f32.mrb[0].mxu0
    %v447 = vadd.f32 0.0, %v446
    %v448 = vpop.f32.mrb[0].mxu0
    %449 = vmatprep.mubr.f32.mxu0 %v379
    %450 = vmatmul.mubr.f32.gmra.mrb[0].mxu0 %v378
    %v451 = vpop.f32.mrb[0].mxu0
    %v452 = vadd.f32 0.0, %v451
    %v453 = vpop.f32.mrb[0].mxu0
    %454 = vdwg.mxu0
    %455 = vmatprep.subr.mxu0 0.0
    %456 = vmatpush1.msra.mxu0 1.0
    %457 = vmatprep.subr.mxu0 0.0
    %458 = vmatpush1.msra.mxu0 1.0
    %459 = vmatprep.subr.mxu0 0.0
    %460 = vmatpush1.msra.mxu0 1.0
    %461 = vmatprep.subr.mxu0 0.0
    %462 = vmatpush1.msra.mxu0 1.0
    %463 = vmatprep.subr.mxu0 0.0
    %464 = vmatpush1.msra.mxu0 1.0
    %465 = vmatprep.subr.mxu0 0.0
    %466 = vmatpush1.msra.mxu0 1.0
    %467 = vmatprep.subr.mxu0 0.0
    %468 = vmatpush1.msra.mxu0 1.0
    %469 = vmatprep.subr.mxu0 0.0
    %470 = vmatpush1.msra.mxu0 1.0
    %471 = vmatprep.subr.mxu0 0.0
    %472 = vmatpush1.msra.mxu0 1.0
    %473 = vmatprep.subr.mxu0 0.0
    %474 = vmatpush1.msra.mxu0 1.0
    %475 = vmatprep.subr.mxu0 0.0
    %476 = vmatpush1.msra.mxu0 1.0
    %477 = vmatprep.subr.mxu0 0.0
    %478 = vmatpush1.msra.mxu0 1.0
    %479 = vmatprep.subr.mxu0 0.0
    %480 = vmatpush1.msra.mxu0 1.0
    %481 = vmatprep.subr.mxu0 0.0
    %482 = vmatpush1.msra.mxu0 1.0
    %483 = vmatprep.subr.mxu0 0.0
    %484 = vmatpush1.msra.mxu0 1.0
    %485 = vmatprep.subr.mxu0 0.0
    %486 = vmatpush1.msra.mxu0 1.0
    %487 = vmatprep.subr.mxu0 0.0
    %488 = vmatpush1.msra.mxu0 0.0
    %489 = vmatprep.subr.mxu0 0.0
    %490 = vmatpush1.msra.mxu0 0.0
    %491 = vmatprep.subr.mxu0 0.0
    %492 = vmatpush1.msra.mxu0 0.0
    %493 = vmatprep.subr.mxu0 0.0
    %494 = vmatpush1.msra.mxu0 0.0
    %495 = vmatprep.subr.mxu0 0.0
    %496 = vmatpush1.msra.mxu0 0.0
    %497 = vmatprep.subr.mxu0 0.0
    %498 = vmatpush1.msra.mxu0 0.0
    %499 = vmatprep.subr.mxu0 0.0
    %500 = vmatpush1.msra.mxu0 0.0
    %501 = vmatprep.subr.mxu0 0.0
    %502 = vmatpush1.msra.mxu0 0.0
    %503 = vmatprep.subr.mxu0 0.0
    %504 = vmatpush1.msra.mxu0 0.0
    %505 = vmatprep.subr.mxu0 0.0
    %506 = vmatpush1.msra.mxu0 0.0
    %507 = vmatprep.subr.mxu0 0.0
    %508 = vmatpush1.msra.mxu0 0.0
    %509 = vmatprep.subr.mxu0 0.0
    %510 = vmatpush1.msra.mxu0 0.0
    %511 = vmatprep.subr.mxu0 0.0
    %512 = vmatpush1.msra.mxu0 0.0
    %513 = vmatprep.subr.mxu0 0.0
    %514 = vmatpush1.msra.mxu0 0.0
    %515 = vmatprep.subr.mxu0 0.0
    %516 = vmatpush1.msra.mxu0 0.0
    %517 = vmatprep.subr.mxu0 0.0
    %518 = vmatpush1.msra.mxu0 0.0
    %519 = vmatprep.mubr.f32.mxu0 0.0
    %520 = vmatmul.mubr.f32.gmra.mrb[0].mxu0 %v374
    %v521 = vpop.f32.mrb[0].mxu0
    %v522 = vadd.f32 %v447, %v521
    %v523 = vpop.f32.mrb[0].mxu0
    %524 = vmatprep.mubr.f32.mxu0 0.0
    %525 = vmatmul.mubr.f32.gmra.mrb[0].mxu0 %v375
    %v526 = vpop.f32.mrb[0].mxu0
    %v527 = vadd.f32 %v452, %v526
    %v528 = vpop.f32.mrb[0].mxu0
    %529 = vdwg.mxu0
    %v530 = vmul.f32 %v358, %v358
    %v531 = vmul.f32 %v362, %v362
    %v532 = vmul.f32 %v366, %v366
    %v533 = vmul.f32 %v367, %v367
    %v534 = vmul.f32 %v370, %v370
    %v535 = vmul.f32 %v371, %v371
    %536 = vmatprep.subr.mxu0 0.0
    %537 = vmatpush1.msra.mxu0 1.0
    %538 = vmatprep.subr.mxu0 0.0
    %539 = vmatpush1.msra.mxu0 1.0
    %540 = vmatprep.subr.mxu0 0.0
    %541 = vmatpush1.msra.mxu0 1.0
    %542 = vmatprep.subr.mxu0 0.0
    %543 = vmatpush1.msra.mxu0 1.0
    %544 = vmatprep.subr.mxu0 0.0
    %545 = vmatpush1.msra.mxu0 1.0
    %546 = vmatprep.subr.mxu0 0.0
    %547 = vmatpush1.msra.mxu0 1.0
    %548 = vmatprep.subr.mxu0 0.0
    %549 = vmatpush1.msra.mxu0 1.0
    %550 = vmatprep.subr.mxu0 0.0
    %551 = vmatpush1.msra.mxu0 1.0
    %552 = vmatprep.subr.mxu0 0.0
    %553 = vmatpush1.msra.mxu0 1.0
    %554 = vmatprep.subr.mxu0 0.0
    %555 = vmatpush1.msra.mxu0 1.0
    %556 = vmatprep.subr.mxu0 0.0
    %557 = vmatpush1.msra.mxu0 1.0
    %558 = vmatprep.subr.mxu0 0.0
    %559 = vmatpush1.msra.mxu0 1.0
    %560 = vmatprep.subr.mxu0 0.0
    %561 = vmatpush1.msra.mxu0 1.0
    %562 = vmatprep.subr.mxu0 0.0
    %563 = vmatpush1.msra.mxu0 1.0
    %564 = vmatprep.subr.mxu0 0.0
    %565 = vmatpush1.msra.mxu0 1.0
    %566 = vmatprep.subr.mxu0 0.0
    %567 = vmatpush1.msra.mxu0 1.0
    %568 = vmatprep.subr.mxu0 0.0
    %569 = vmatpush1.msra.mxu0 1.0
    %570 = vmatprep.subr.mxu0 0.0
    %571 = vmatpush1.msra.mxu0 1.0
    %572 = vmatprep.subr.mxu0 0.0
    %573 = vmatpush1.msra.mxu0 1.0
    %574 = vmatprep.subr.mxu0 0.0
    %575 = vmatpush1.msra.mxu0 1.0
    %576 = vmatprep.subr.mxu0 0.0
    %577 = vmatpush1.msra.mxu0 1.0
    %578 = vmatprep.subr.mxu0 0.0
    %579 = vmatpush1.msra.mxu0 1.0
    %580 = vmatprep.subr.mxu0 0.0
    %581 = vmatpush1.msra.mxu0 1.0
    %582 = vmatprep.subr.mxu0 0.0
    %583 = vmatpush1.msra.mxu0 1.0
    %584 = vmatprep.subr.mxu0 0.0
    %585 = vmatpush1.msra.mxu0 1.0
    %586 = vmatprep.subr.mxu0 0.0
    %587 = vmatpush1.msra.mxu0 1.0
    %588 = vmatprep.subr.mxu0 0.0
    %589 = vmatpush1.msra.mxu0 1.0
    %590 = vmatprep.subr.mxu0 0.0
    %591 = vmatpush1.msra.mxu0 1.0
    %592 = vmatprep.subr.mxu0 0.0
    %593 = vmatpush1.msra.mxu0 1.0
    %594 = vmatprep.subr.mxu0 0.0
    %595 = vmatpush1.msra.mxu0 1.0
    %596 = vmatprep.subr.mxu0 0.0
    %597 = vmatpush1.msra.mxu0 1.0
    %598 = vmatprep.subr.mxu0 0.0
    %599 = vmatpush1.msra.mxu0 1.0
    %600 = vmatprep.mubr.f32.mxu0 %v533
    %601 = vmatmul.mubr.f32.gmra.mrb[0].mxu0 %v532
    %v602 = vpop.f32.mrb[0].mxu0
    %v603 = vadd.f32 0.0, %v602
    %v604 = vpop.f32.mrb[0].mxu0
    %605 = vmatprep.mubr.f32.mxu0 %v535
    %606 = vmatmul.mubr.f32.gmra.mrb[0].mxu0 %v534
    %v607 = vpop.f32.mrb[0].mxu0
    %v608 = vadd.f32 0.0, %v607
    %v609 = vpop.f32.mrb[0].mxu0
    %610 = vdwg.mxu0
    %611 = vmatprep.subr.mxu0 0.0
    %612 = vmatpush1.msra.mxu0 1.0
    %613 = vmatprep.subr.mxu0 0.0
    %614 = vmatpush1.msra.mxu0 1.0
    %615 = vmatprep.subr.mxu0 0.0
    %616 = vmatpush1.msra.mxu0 1.0
    %617 = vmatprep.subr.mxu0 0.0
    %618 = vmatpush1.msra.mxu0 1.0
    %619 = vmatprep.subr.mxu0 0.0
    %620 = vmatpush1.msra.mxu0 1.0
    %621 = vmatprep.subr.mxu0 0.0
    %622 = vmatpush1.msra.mxu0 1.0
    %623 = vmatprep.subr.mxu0 0.0
    %624 = vmatpush1.msra.mxu0 1.0
    %625 = vmatprep.subr.mxu0 0.0
    %626 = vmatpush1.msra.mxu0 1.0
    %627 = vmatprep.subr.mxu0 0.0
    %628 = vmatpush1.msra.mxu0 1.0
    %629 = vmatprep.subr.mxu0 0.0
    %630 = vmatpush1.msra.mxu0 1.0
    %631 = vmatprep.subr.mxu0 0.0
    %632 = vmatpush1.msra.mxu0 1.0
    %633 = vmatprep.subr.mxu0 0.0
    %634 = vmatpush1.msra.mxu0 1.0
    %635 = vmatprep.subr.mxu0 0.0
    %636 = vmatpush1.msra.mxu0 1.0
    %637 = vmatprep.subr.mxu0 0.0
    %638 = vmatpush1.msra.mxu0 1.0
    %639 = vmatprep.subr.mxu0 0.0
    %640 = vmatpush1.msra.mxu0 1.0
    %641 = vmatprep.subr.mxu0 0.0
    %642 = vmatpush1.msra.mxu0 1.0
    %643 = vmatprep.subr.mxu0 0.0
    %644 = vmatpush1.msra.mxu0 0.0
    %645 = vmatprep.subr.mxu0 0.0
    %646 = vmatpush1.msra.mxu0 0.0
    %647 = vmatprep.subr.mxu0 0.0
    %648 = vmatpush1.msra.mxu0 0.0
    %649 = vmatprep.subr.mxu0 0.0
    %650 = vmatpush1.msra.mxu0 0.0
    %651 = vmatprep.subr.mxu0 0.0
    %652 = vmatpush1.msra.mxu0 0.0
    %653 = vmatprep.subr.mxu0 0.0
    %654 = vmatpush1.msra.mxu0 0.0
    %655 = vmatprep.subr.mxu0 0.0
    %656 = vmatpush1.msra.mxu0 0.0
    %657 = vmatprep.subr.mxu0 0.0
    %658 = vmatpush1.msra.mxu0 0.0
    %659 = vmatprep.subr.mxu0 0.0
    %660 = vmatpush1.msra.mxu0 0.0
    %661 = vmatprep.subr.mxu0 0.0
    %662 = vmatpush1.msra.mxu0 0.0
    %663 = vmatprep.subr.mxu0 0.0
    %664 = vmatpush1.msra.mxu0 0.0
    %665 = vmatprep.subr.mxu0 0.0
    %666 = vmatpush1.msra.mxu0 0.0
    %667 = vmatprep.subr.mxu0 0.0
    %668 = vmatpush1.msra.mxu0 0.0
    %669 = vmatprep.subr.mxu0 0.0
    %670 = vmatpush1.msra.mxu0 0.0
    %671 = vmatprep.subr.mxu0 0.0
    %672 = vmatpush1.msra.mxu0 0.0
    %673 = vmatprep.subr.mxu0 0.0
    %674 = vmatpush1.msra.mxu0 0.0
    %675 = vmatprep.mubr.f32.mxu0 0.0
    %676 = vmatmul.mubr.f32.gmra.mrb[0].mxu0 %v530
    %v677 = vpop.f32.mrb[0].mxu0
    %v678 = vadd.f32 %v603, %v677
    %v679 = vpop.f32.mrb[0].mxu0
    %680 = vmatprep.mubr.f32.mxu0 0.0
    %681 = vmatmul.mubr.f32.gmra.mrb[0].mxu0 %v531
    %v682 = vpop.f32.mrb[0].mxu0
    %v683 = vadd.f32 %v608, %v682
    %v684 = vpop.f32.mrb[0].mxu0
    %685 = vdwg.mxu0
    %v686 = vmul.f32 %v360, %v360
    %v687 = vmul.f32 %v364, %v364
    %v688 = vmul.f32 %v368, %v368
    %v689 = vmul.f32 %v369, %v369
    %v690 = vmul.f32 %v372, %v372
    %v691 = vmul.f32 %v373, %v373
    %692 = vmatprep.subr.mxu0 0.0
    %693 = vmatpush1.msra.mxu0 1.0
    %694 = vmatprep.subr.mxu0 0.0
    %695 = vmatpush1.msra.mxu0 1.0
    %696 = vmatprep.subr.mxu0 0.0
    %697 = vmatpush1.msra.mxu0 1.0
    %698 = vmatprep.subr.mxu0 0.0
    %699 = vmatpush1.msra.mxu0 1.0
    %700 = vmatprep.subr.mxu0 0.0
    %701 = vmatpush1.msra.mxu0 1.0
    %702 = vmatprep.subr.mxu0 0.0
    %703 = vmatpush1.msra.mxu0 1.0
    %704 = vmatprep.subr.mxu0 0.0
    %705 = vmatpush1.msra.mxu0 1.0
    %706 = vmatprep.subr.mxu0 0.0
    %707 = vmatpush1.msra.mxu0 1.0
    %708 = vmatprep.subr.mxu0 0.0
    %709 = vmatpush1.msra.mxu0 1.0
    %710 = vmatprep.subr.mxu0 0.0
    %711 = vmatpush1.msra.mxu0 1.0
    %712 = vmatprep.subr.mxu0 0.0
    %713 = vmatpush1.msra.mxu0 1.0
    %714 = vmatprep.subr.mxu0 0.0
    %715 = vmatpush1.msra.mxu0 1.0
    %716 = vmatprep.subr.mxu0 0.0
    %717 = vmatpush1.msra.mxu0 1.0
    %718 = vmatprep.subr.mxu0 0.0
    %719 = vmatpush1.msra.mxu0 1.0
    %720 = vmatprep.subr.mxu0 0.0
    %721 = vmatpush1.msra.mxu0 1.0
    %722 = vmatprep.subr.mxu0 0.0
    %723 = vmatpush1.msra.mxu0 1.0
    %724 = vmatprep.subr.mxu0 0.0
    %725 = vmatpush1.msra.mxu0 1.0
    %726 = vmatprep.subr.mxu0 0.0
    %727 = vmatpush1.msra.mxu0 1.0
    %728 = vmatprep.subr.mxu0 0.0
    %729 = vmatpush1.msra.mxu0 1.0
    %730 = vmatprep.subr.mxu0 0.0
    %731 = vmatpush1.msra.mxu0 1.0
    %732 = vmatprep.subr.mxu0 0.0
    %733 = vmatpush1.msra.mxu0 1.0
    %734 = vmatprep.subr.mxu0 0.0
    %735 = vmatpush1.msra.mxu0 1.0
    %736 = vmatprep.subr.mxu0 0.0
    %737 = vmatpush1.msra.mxu0 1.0
    %738 = vmatprep.subr.mxu0 0.0
    %739 = vmatpush1.msra.mxu0 1.0
    %740 = vmatprep.subr.mxu0 0.0
    %741 = vmatpush1.msra.mxu0 1.0
    %742 = vmatprep.subr.mxu0 0.0
    %743 = vmatpush1.msra.mxu0 1.0
    %744 = vmatprep.subr.mxu0 0.0
    %745 = vmatpush1.msra.mxu0 1.0
    %746 = vmatprep.subr.mxu0 0.0
    %747 = vmatpush1.msra.mxu0 1.0
    %748 = vmatprep.subr.mxu0 0.0
    %749 = vmatpush1.msra.mxu0 1.0
    %750 = vmatprep.subr.mxu0 0.0
    %751 = vmatpush1.msra.mxu0 1.0
    %752 = vmatprep.subr.mxu0 0.0
    %753 = vmatpush1.msra.mxu0 1.0
    %754 = vmatprep.subr.mxu0 0.0
    %755 = vmatpush1.msra.mxu0 1.0
    %756 = vmatprep.mubr.f32.mxu0 %v689
    %757 = vmatmul.mubr.f32.gmra.mrb[0].mxu0 %v688
    %v758 = vpop.f32.mrb[0].mxu0
    %v759 = vadd.f32 0.0, %v758
    %v760 = vpop.f32.mrb[0].mxu0
    %761 = vmatprep.mubr.f32.mxu0 %v691
    %762 = vmatmul.mubr.f32.gmra.mrb[0].mxu0 %v690
    %v763 = vpop.f32.mrb[0].mxu0
    %v764 = vadd.f32 0.0, %v763
    %v765 = vpop.f32.mrb[0].mxu0
    %766 = vdwg.mxu0
    %767 = vmatprep.subr.mxu0 0.0
    %768 = vmatpush1.msra.mxu0 1.0
    %769 = vmatprep.subr.mxu0 0.0
    %770 = vmatpush1.msra.mxu0 1.0
    %771 = vmatprep.subr.mxu0 0.0
    %772 = vmatpush1.msra.mxu0 1.0
    %773 = vmatprep.subr.mxu0 0.0
    %774 = vmatpush1.msra.mxu0 1.0
    %775 = vmatprep.subr.mxu0 0.0
    %776 = vmatpush1.msra.mxu0 1.0
    %777 = vmatprep.subr.mxu0 0.0
    %778 = vmatpush1.msra.mxu0 1.0
    %779 = vmatprep.subr.mxu0 0.0
    %780 = vmatpush1.msra.mxu0 1.0
    %781 = vmatprep.subr.mxu0 0.0
    %782 = vmatpush1.msra.mxu0 1.0
    %783 = vmatprep.subr.mxu0 0.0
    %784 = vmatpush1.msra.mxu0 1.0
    %785 = vmatprep.subr.mxu0 0.0
    %786 = vmatpush1.msra.mxu0 1.0
    %787 = vmatprep.subr.mxu0 0.0
    %788 = vmatpush1.msra.mxu0 1.0
    %789 = vmatprep.subr.mxu0 0.0
    %790 = vmatpush1.msra.mxu0 1.0
    %791 = vmatprep.subr.mxu0 0.0
    %792 = vmatpush1.msra.mxu0 1.0
    %793 = vmatprep.subr.mxu0 0.0
    %794 = vmatpush1.msra.mxu0 1.0
    %795 = vmatprep.subr.mxu0 0.0
    %796 = vmatpush1.msra.mxu0 1.0
    %797 = vmatprep.subr.mxu0 0.0
    %798 = vmatpush1.msra.mxu0 1.0
    %799 = vmatprep.subr.mxu0 0.0
    %800 = vmatpush1.msra.mxu0 0.0
    %801 = vmatprep.subr.mxu0 0.0
    %802 = vmatpush1.msra.mxu0 0.0
    %803 = vmatprep.subr.mxu0 0.0
    %804 = vmatpush1.msra.mxu0 0.0
    %805 = vmatprep.subr.mxu0 0.0
    %806 = vmatpush1.msra.mxu0 0.0
    %807 = vmatprep.subr.mxu0 0.0
    %808 = vmatpush1.msra.mxu0 0.0
    %809 = vmatprep.subr.mxu0 0.0
    %810 = vmatpush1.msra.mxu0 0.0
    %811 = vmatprep.subr.mxu0 0.0
    %812 = vmatpush1.msra.mxu0 0.0
    %813 = vmatprep.subr.mxu0 0.0
    %814 = vmatpush1.msra.mxu0 0.0
    %815 = vmatprep.subr.mxu0 0.0
    %816 = vmatpush1.msra.mxu0 0.0
    %817 = vmatprep.subr.mxu0 0.0
    %818 = vmatpush1.msra.mxu0 0.0
    %819 = vmatprep.subr.mxu0 0.0
    %820 = vmatpush1.msra.mxu0 0.0
    %821 = vmatprep.subr.mxu0 0.0
    %822 = vmatpush1.msra.mxu0 0.0
    %823 = vmatprep.subr.mxu0 0.0
    %824 = vmatpush1.msra.mxu0 0.0
    %825 = vmatprep.subr.mxu0 0.0
    %826 = vmatpush1.msra.mxu0 0.0
    %827 = vmatprep.subr.mxu0 0.0
    %828 = vmatpush1.msra.mxu0 0.0
    %829 = vmatprep.subr.mxu0 0.0
    %830 = vmatpush1.msra.mxu0 0.0
    %831 = vmatprep.mubr.f32.mxu0 0.0
    %832 = vmatmul.mubr.f32.gmra.mrb[0].mxu0 %v686
    %v833 = vpop.f32.mrb[0].mxu0
    %v834 = vadd.f32 %v759, %v833
    %v835 = vpop.f32.mrb[0].mxu0
    %836 = vmatprep.mubr.f32.mxu0 0.0
    %837 = vmatmul.mubr.f32.gmra.mrb[0].mxu0 %v687
    %v838 = vpop.f32.mrb[0].mxu0
    %v839 = vadd.f32 %v764, %v838
    %v840 = vpop.f32.mrb[0].mxu0
    %841 = vdwg.mxu0
    %v842 = vmax.f32 %v678, 1e-16
    %v843 = vmax.f32 %v683, 1e-16
    %v844 = vrsqrt.pop %v842
    %v845 = vrsqrt.pop %v843
    %v846 = vmax.f32 %v834, 1e-16
    %v847 = vmax.f32 %v839, 1e-16
    %v848 = vrsqrt.pop %v846
    %v849 = vrsqrt.pop %v847
    %v850 = vmul.f32 %v844, %v848
    %v851 = vmul.f32 %v845, %v849
    %v852 = vmul.f32 %v522, %v850
    %v853 = vmul.f32 %v527, %v851
    %v854 = vadd.f32 %v852, 1.0
    %v855 = vadd.f32 %v853, 1.0
    %v856 = vmul.f32 %v854, 0.5
    %v857 = vmul.f32 %v855, 0.5
    %v858 = vlaneseq
    %v859 = vshrl.u32 %v858, 7
    %v860 = vadd.s32 %v859, 8
    %v861 = vlaneseq
    %v862 = vand.u32 %v861, 127
    %vm863 = vcmp.eq.s32.totalorder %v859, %v862
    %vm864 = vcmp.eq.s32.totalorder %v860, %v862
    %v865 = vsel %vm863, 1, 0
    %v866 = vsel %vm864, 1, 0
    %v867 = vcvt.s32.f32 %v865
    %v868 = vcvt.s32.f32 %v866
    %870 = vset.pattern.permute.xlu0 0
    %871 = vperm.xlu0 %870, %v856
    %v872 = vpop.permute.xlu0 %871
    %875 = vset.pattern.permute.xlu0 0
    %876 = vperm.xlu0 %875, %v857
    %v877 = vpop.permute.xlu0 %876
    %v879 = vmul.f32 %v867, %v872
    %v880 = vmul.f32 %v868, %v877
    %vm881 = vcmask 130048
    %v883 = vsel %vm881, 1.0, 0
    %885 = vmatprep.subr.mxu0 0.0
    %886 = vmatpush1.msra.mxu0 %v879
    %887 = vmatprep.subr.mxu0 0.0
    %888 = vmatpush1.msra.mxu0 %v880
    %889 = vmatprep.subr.mxu0 0.0
    %890 = vmatpush1.msra.mxu0 0.0
    %891 = vmatprep.subr.mxu0 0.0
    %892 = vmatpush1.msra.mxu0 0.0
    %893 = vmatprep.subr.mxu0 0.0
    %894 = vmatpush1.msra.mxu0 0.0
    %895 = vmatprep.subr.mxu0 0.0
    %896 = vmatpush1.msra.mxu0 0.0
    %897 = vmatprep.subr.mxu0 0.0
    %898 = vmatpush1.msra.mxu0 0.0
    %899 = vmatprep.subr.mxu0 0.0
    %900 = vmatpush1.msra.mxu0 0.0
    %901 = vmatprep.subr.mxu0 0.0
    %902 = vmatpush1.msra.mxu0 0.0
    %903 = vmatprep.subr.mxu0 0.0
    %904 = vmatpush1.msra.mxu0 0.0
    %905 = vmatprep.subr.mxu0 0.0
    %906 = vmatpush1.msra.mxu0 0.0
    %907 = vmatprep.subr.mxu0 0.0
    %908 = vmatpush1.msra.mxu0 0.0
    %909 = vmatprep.subr.mxu0 0.0
    %910 = vmatpush1.msra.mxu0 0.0
    %911 = vmatprep.subr.mxu0 0.0
    %912 = vmatpush1.msra.mxu0 0.0
    %913 = vmatprep.subr.mxu0 0.0
    %914 = vmatpush1.msra.mxu0 0.0
    %915 = vmatprep.subr.mxu0 0.0
    %916 = vmatpush1.msra.mxu0 0.0
    %917 = vmatprep.subr.mxu0 0.0
    %918 = vmatpush1.msra.mxu0 0.0
    %919 = vmatprep.subr.mxu0 0.0
    %920 = vmatpush1.msra.mxu0 0.0
    %921 = vmatprep.subr.mxu0 0.0
    %922 = vmatpush1.msra.mxu0 0.0
    %923 = vmatprep.subr.mxu0 0.0
    %924 = vmatpush1.msra.mxu0 0.0
    %925 = vmatprep.subr.mxu0 0.0
    %926 = vmatpush1.msra.mxu0 0.0
    %927 = vmatprep.subr.mxu0 0.0
    %928 = vmatpush1.msra.mxu0 0.0
    %929 = vmatprep.subr.mxu0 0.0
    %930 = vmatpush1.msra.mxu0 0.0
    %931 = vmatprep.subr.mxu0 0.0
    %932 = vmatpush1.msra.mxu0 0.0
    %933 = vmatprep.subr.mxu0 0.0
    %934 = vmatpush1.msra.mxu0 0.0
    %935 = vmatprep.subr.mxu0 0.0
    %936 = vmatpush1.msra.mxu0 0.0
    %937 = vmatprep.subr.mxu0 0.0
    %938 = vmatpush1.msra.mxu0 0.0
    %939 = vmatprep.subr.mxu0 0.0
    %940 = vmatpush1.msra.mxu0 0.0
    %941 = vmatprep.subr.mxu0 0.0
    %942 = vmatpush1.msra.mxu0 0.0
    %943 = vmatprep.subr.mxu0 0.0
    %944 = vmatpush1.msra.mxu0 0.0
    %945 = vmatprep.subr.mxu0 0.0
    %946 = vmatpush1.msra.mxu0 0.0
    %947 = vmatprep.subr.mxu0 0.0
    %948 = vmatpush1.msra.mxu0 0.0
    %949 = vmatprep.mubr.f32.mxu0 0.0
    %950 = vmatmul.mubr.f32.gmra.mrb[0].mxu0 %v883
    %v951 = vpop.f32.mrb[0].mxu0
    %v952 = vadd.f32 0.0, %v951
    %v953 = vpop.f32.mrb[0].mxu0
    %954 = vdwg.mxu0
    %vm955 = vcmask 122880
    %956 = vst.msk [vmem:[#allocation2] sm:$0x1] %vm955, %v952
    // Predicated region
    $region22: #{pewe_forward.1} parent=1 // pred_check
      _
    $region23: #{pewe_forward.1} parent=1 // pred_check_branch
      %958 = sbr.rel (0) target = $region25
    $region24: #{pewe_forward.1} parent=1 // pred_region
      %s960 = ssub.s32 16, 16
      %961 = vsyncadd [#allocation3], %s960
      %s963 = sshll.u32 [#allocation2], 4
      %s964 = int_to_ptr.vmem [resolvable:$true] %s963
      %966 = dma.vmem_to_hbm [thread:$0]  %s964, 16, %s5, [#allocation3]
    $region25: #{pewe_forward.1} parent=1 // pred_fallthru
      _
    // Predicated region
    $region26: #{pewe_forward.1} parent=1 // pred_check
      _
    $region27: #{pewe_forward.1} parent=1 // pred_check_branch
      %968 = sbr.rel (0) target = $region29
    $region28: #{pewe_forward.1} parent=1 // pred_region
      %969 = dma.done [#allocation3], 16
    $region29: #{pewe_forward.1} parent=1 // pred_fallthru
      _
    %970 = vsyncpa [#allocation3], 1

</llo_original>
